<compile_context>
chip_gen: v5e
topology: v5e:2x2
jax: 0.10.0
libtpu: 0.0.40
codegen_flags: <defaults>
</compile_context>

<pallas_src>
import jax
import jax.numpy as jnp
from jax.experimental import pallas as pl
from jax.experimental.pallas import tpu as pltpu


def _ceil_to(x, m):
    return ((x + m - 1) // m) * m


def _pick_tile(total, candidates):
    """Largest candidate that evenly divides `total` (candidates descending)."""
    for c in candidates:
        if c <= total and total % c == 0:
            return c
    return total


# ---------------------------------------------------------------------------
# Kernel 1: seq_fts = seq @ W   (flattened over B*N rows, lane-dense output)
# ---------------------------------------------------------------------------
def _linear_kernel(x_ref, w_ref, o_ref):
    o_ref[...] = jnp.dot(
        x_ref[...], w_ref[...], preferred_element_type=jnp.float32
    ).astype(o_ref.dtype)


# ---------------------------------------------------------------------------
# Kernel 2a: out = PReLU(adj_rowtile @ seq_fts + bias), fts resident per batch
# ---------------------------------------------------------------------------
def _agg_resident_kernel(alpha_ref, adj_ref, fts_ref, bias_ref, out_ref):
    # adj_ref: (1, TM, N_pad), fts_ref: (1, N_pad, F_pad), bias_ref: (1, F_pad)
    out = jnp.dot(adj_ref[0], fts_ref[0], preferred_element_type=jnp.float32)
    out = out + bias_ref[...]
    alpha = alpha_ref[0]
    out = jnp.where(out >= 0, out, alpha * out)
    out_ref[0] = out.astype(out_ref.dtype)


# ---------------------------------------------------------------------------
# Kernel 2b: out = PReLU(adj @ seq_fts + bias), k-tiled with resident f32 acc
# ---------------------------------------------------------------------------
def _agg_ktiled_kernel(alpha_ref, adj_ref, fts_ref, bias_ref, out_ref, acc_ref):
    # adj_ref: (1, TM, TK), fts_ref: (1, TK, F_pad), bias_ref: (1, F_pad)
    # out_ref: (1, TM, F_pad), acc_ref: VMEM scratch (TM, F_pad) f32
    k = pl.program_id(2)

    @pl.when(k == 0)
    def _():
        acc_ref[...] = jnp.zeros_like(acc_ref)

    acc_ref[...] += jnp.dot(
        adj_ref[0], fts_ref[0], preferred_element_type=jnp.float32
    )

    @pl.when(k == pl.num_programs(2) - 1)
    def _():
        out = acc_ref[...] + bias_ref[...]
        alpha = alpha_ref[0]
        out = jnp.where(out >= 0, out, alpha * out)
        out_ref[0] = out.astype(out_ref.dtype)


def gcn_forward(seq, adj, weight_t, bias, alpha, *, compute_dtype=None):
    """seq: (B,N,F_in), adj: (B,N,N), weight_t: (F_in,F_out), bias: (F_out,),
    alpha: scalar PReLU slope.

    compute_dtype: optional dtype (e.g. jnp.bfloat16) for the adj / seq_fts
    operands of the aggregation matmul (accumulation stays f32). bf16 halves
    the dominant O(B*N^2) HBM traffic but changes results at ~1e-3 vs the
    f32 reference -- flagged for the model owner; default keeps f32.
    """
    B, N, F_in = seq.shape
    F_out = weight_t.shape[1]
    out_dtype = seq.dtype
    compute_dtype = jnp.dtype(seq.dtype if compute_dtype is None else compute_dtype)
    out_itemsize = jnp.dtype(out_dtype).itemsize
    itemsize = compute_dtype.itemsize

    # --- pad to lane/sublane friendly sizes (sliced back at the end) -------
    F_pad = _ceil_to(F_out, 128)   # lane-dense output stores
    N_pad = _ceil_to(N, 128)       # tileable node dimension
    if N_pad != N:
        seq = jnp.pad(seq, ((0, 0), (0, N_pad - N), (0, 0)))
        adj = jnp.pad(adj, ((0, 0), (0, N_pad - N), (0, N_pad - N)))
    if F_pad != F_out:
        weight_t = jnp.pad(weight_t, ((0, 0), (0, F_pad - F_out)))
        bias = jnp.pad(bias, ((0, F_pad - F_out),))

    bias2d = bias.astype(jnp.float32).reshape(1, F_pad)
    alpha1d = jnp.reshape(jnp.asarray(alpha, dtype=jnp.float32), (1,))

    # --- kernel 1: seq_fts = seq @ W over flattened (B*N_pad, F_in) --------
    M = B * N_pad
    TM_lin = _pick_tile(M, (1024, 512, 256, 128))
    seq_flat = seq.reshape(M, F_in)
    fts_flat = pl.pallas_call(
        _linear_kernel,
        out_shape=jax.ShapeDtypeStruct((M, F_pad), compute_dtype),
        grid=(M // TM_lin,),
        in_specs=[
            pl.BlockSpec((TM_lin, F_in), lambda i: (i, 0)),
            pl.BlockSpec((F_in, F_pad), lambda i: (0, 0)),
        ],
        out_specs=pl.BlockSpec((TM_lin, F_pad), lambda i: (i, 0)),
        compiler_params=pltpu.CompilerParams(
            dimension_semantics=("parallel",)),
    )(seq_flat, weight_t)
    fts = fts_flat.reshape(B, N_pad, F_pad)

    adj_c = adj.astype(compute_dtype)

    flops = 2 * B * N_pad * N_pad * F_pad
    bytes_accessed = (B * N_pad * N_pad * itemsize
                      + B * N_pad * F_pad * itemsize
                      + B * N_pad * F_pad * out_itemsize)

    # --- kernel 2: adj @ seq_fts + bias + PReLU -----------------------------
    TM = _pick_tile(N_pad, (256, 128))        # output row tile

    # VMEM footprint of the fts-resident path (double-buffered BlockSpecs).
    resident_bytes = (2 * TM * N_pad * itemsize       # adj row tiles
                      + 2 * N_pad * F_pad * itemsize  # full fts slab (per batch)
                      + 2 * TM * F_pad * out_itemsize # out tiles
                      + 2 * F_pad * 4)                # bias

    if resident_bytes <= (24 << 20):
        # ---- path (a): fts slab resident per batch, single dot per tile ----
        vmem_limit = int(min(56 << 20, max(32 << 20, resident_bytes + (4 << 20))))
        out_pad = pl.pallas_call(
            _agg_resident_kernel,
            out_shape=jax.ShapeDtypeStruct((B, N_pad, F_pad), out_dtype),
            grid=(B, N_pad // TM),
            in_specs=[
                pl.BlockSpec(memory_space=pltpu.MemorySpace.SMEM),         # alpha
                pl.BlockSpec((1, TM, N_pad), lambda b, i: (b, i, 0)),      # adj
                pl.BlockSpec((1, N_pad, F_pad), lambda b, i: (b, 0, 0)),   # fts
                pl.BlockSpec((1, F_pad), lambda b, i: (0, 0)),             # bias
            ],
            out_specs=pl.BlockSpec((1, TM, F_pad), lambda b, i: (b, i, 0)),
            compiler_params=pltpu.CompilerParams(
                dimension_semantics=("parallel", "parallel"),
                vmem_limit_bytes=vmem_limit),
            cost_estimate=pl.CostEstimate(
                flops=flops, transcendentals=0, bytes_accessed=bytes_accessed),
        )(alpha1d, adj_c, fts, bias2d)
    else:
        # ---- path (b): k-tiled reduction with resident f32 accumulator -----
        TK = _pick_tile(N_pad, (512, 256, 128))   # reduction tile (last axis)
        vmem_est = (2 * TM * TK * itemsize        # adj tiles (double-buffered)
                    + 2 * TK * F_pad * itemsize   # fts tiles (double-buffered)
                    + 2 * TM * F_pad * out_itemsize
                    + TM * F_pad * 4              # resident accumulator
                    + 2 * F_pad * 4)              # bias
        vmem_limit = int(min(56 << 20, max(32 << 20, 2 * vmem_est)))
        out_pad = pl.pallas_call(
            _agg_ktiled_kernel,
            out_shape=jax.ShapeDtypeStruct((B, N_pad, F_pad), out_dtype),
            grid=(B, N_pad // TM, N_pad // TK),
            in_specs=[
                pl.BlockSpec(memory_space=pltpu.MemorySpace.SMEM),          # alpha
                pl.BlockSpec((1, TM, TK), lambda b, i, k: (b, i, k)),       # adj
                pl.BlockSpec((1, TK, F_pad), lambda b, i, k: (b, k, 0)),    # fts
                pl.BlockSpec((1, F_pad), lambda b, i, k: (0, 0)),           # bias
            ],
            out_specs=pl.BlockSpec((1, TM, F_pad), lambda b, i, k: (b, i, 0)),
            scratch_shapes=[pltpu.VMEM((TM, F_pad), jnp.float32)],
            compiler_params=pltpu.CompilerParams(
                dimension_semantics=("parallel", "parallel", "arbitrary"),
                vmem_limit_bytes=vmem_limit),
            cost_estimate=pl.CostEstimate(
                flops=flops, transcendentals=0, bytes_accessed=bytes_accessed),
        )(alpha1d, adj_c, fts, bias2d)

    return out_pad[:, :N, :F_out]


if __name__ == "__main__":
    B, N, F_in, F_out = 2, 16, 8, 32

    key = jax.random.PRNGKey(0)
    k_seq, k_adj, k_w = jax.random.split(key, 3)

    seq = jax.random.normal(k_seq, (B, N, F_in), dtype=jnp.float32)
    # symmetric, row-normalized dense adjacency
    a = jax.random.uniform(k_adj, (B, N, N), dtype=jnp.float32)
    adj = (a + jnp.swapaxes(a, 1, 2)) * 0.5
    adj = adj / jnp.sum(adj, axis=-1, keepdims=True)

    # Xavier-uniform init for nn.Linear(in_ft, out_ft, bias=False)
    limit = (6.0 / (F_in + F_out)) ** 0.5
    weight = jax.random.uniform(k_w, (F_out, F_in), dtype=jnp.float32,
                                minval=-limit, maxval=limit)
    weight_t = weight.T                              # (F_in, F_out)
    bias = jnp.zeros((F_out,), dtype=jnp.float32)    # bias.data.fill_(0.0)
    alpha = jnp.float32(0.25)                        # nn.PReLU default init

    out = gcn_forward(seq, adj, weight_t, bias, alpha)
    out = jax.block_until_ready(out)

    # reference in plain JAX (f32)
    ref = jnp.einsum('bnm,bmf->bnf', adj, seq @ weight_t) + bias
    ref = jnp.where(ref >= 0, ref, alpha * ref)
    assert out.shape == (B, N, F_out)
    assert jnp.allclose(out, ref, atol=1e-4, rtol=1e-4), \
        float(jnp.max(jnp.abs(out - ref)))

    print("KERNEL_OK")
</pallas_src>

<mosaic_0001>
module attributes {stable_mosaic.version = 11 : i64} {
  func.func @_linear_kernel(%arg0: i32, %arg1: memref<256x8xf32, #tpu.memory_space<vmem>>, %arg2: memref<8x128xf32, #tpu.memory_space<vmem>>, %arg3: memref<256x128xf32, #tpu.memory_space<vmem>>) attributes {dimension_semantics = [#tpu.dimension_semantics<parallel>], iteration_bounds = array<i64: 1>, scalar_prefetch = 0 : i64, scratch_operands = 0 : i64, tpu.core_type = #tpu.core_type<tc>, window_params = [{transform_indices = @transform_0, window_bounds = array<i64: 256, 8>}, {pipeline_mode = #tpu.pipeline_mode<synchronous>, transform_indices = @transform_1, window_bounds = array<i64: 8, 128>}, {transform_indices = @transform_2, window_bounds = array<i64: 256, 128>}]} {
    %c0 = arith.constant 0 : index
    %c0_0 = arith.constant 0 : index
    %0 = vector.load %arg1[%c0, %c0_0] : memref<256x8xf32, #tpu.memory_space<vmem>>, vector<256x8xf32>
    %c0_1 = arith.constant 0 : index
    %c0_2 = arith.constant 0 : index
    %1 = vector.load %arg2[%c0_1, %c0_2] : memref<8x128xf32, #tpu.memory_space<vmem>>, vector<8x128xf32>
    %cst = arith.constant dense<0.000000e+00> : vector<256x128xf32>
    %2 = tpu.matmul %0, %1, %cst {dimension_numbers = #tpu.dot_dimension_numbers<[1], [0], [0], [1], [0, 0, 1, 1], [], []>} : vector<256x8xf32>, vector<8x128xf32>, vector<256x128xf32> -> vector<256x128xf32>
    %c0_3 = arith.constant 0 : index
    %c0_4 = arith.constant 0 : index
    %3 = vector.load %arg3[%c0_3, %c0_4] : memref<256x128xf32, #tpu.memory_space<vmem>>, vector<256x128xf32>
    tpu.vector_store %arg3[%c0_3, %c0_4], %2 {strides = array<i32>} : memref<256x128xf32, #tpu.memory_space<vmem>>, vector<256x128xf32>,
    return
  }
  func.func @transform_0(%arg0: i32) -> (i32, i32) {
    %c0_i32 = arith.constant 0 : i32
    %c0_i32_0 = arith.constant 0 : i32
    return %arg0, %c0_i32 : i32, i32
  }
  func.func @transform_1(%arg0: i32) -> (i32, i32) {
    %c0_i32 = arith.constant 0 : i32
    %c0_i32_0 = arith.constant 0 : i32
    %c0_i32_1 = arith.constant 0 : i32
    return %c0_i32, %c0_i32_0 : i32, i32
  }
  func.func @transform_2(%arg0: i32) -> (i32, i32) {
    %c0_i32 = arith.constant 0 : i32
    %c0_i32_0 = arith.constant 0 : i32
    return %arg0, %c0_i32 : i32, i32
  }
}

</mosaic_0001>

<llo_original>
// kernel: tpu_custom_call.1
$region0: #{tpu_custom_call.1}
  #allocation0 [shape = 'u32[]', space=smem, size = 0x4, offset = 0x4, fixed_abs, tag = 'smem constant byte address 0x4 - core index']
  #allocation1 [shape = 'u32[72,128]{1,0:T(1,128)}', space=vmem, size = 0x9000, scoped, tag = 'internal scratch']
  %s0 = inlined_call_operand.vmem [shape: f32[256,8], index: 0, kind: input, shape index: {}]
  %s1 = inlined_call_operand.vmem [shape: f32[8,128], index: 1, kind: input, shape index: {}]
  %s2 = inlined_call_operand.hbm [shape: f32[256,128], index: 2, kind: output, shape index: {}]
  %s3 = sld [smem:[#allocation0]]
  $region18: #{tpu_custom_call.1} parent=0
    _
  %s5 = ssub.s32 1, %s3
  %s6 = scalar_select 0, %s5, %s3
  $region1: #{tpu_custom_call.1} parent=0
    #allocation2 [shape = 'u8[131072]{0}', space=vmem, size = 0x20000, scoped, tag = 'output window, operand 0, single buffered']
    #allocation3 [shape = 's32[1]{0}', space=sflag, size = 0x4, scoped, tag = 'scoped memory for tpu_custom_call.1']
    %7 = vsyncpa [#allocation3], 0
    // Predicated region
    $region2: #{tpu_custom_call.1} parent=1 // pred_check
      _
    $region3: #{tpu_custom_call.1} parent=1 // pred_check_branch
      %9 = sbr.rel (0) target = $region5
    $region4: #{tpu_custom_call.1} parent=1 // pred_region
      _
    $region5: #{tpu_custom_call.1} parent=1 // pred_fallthru
      _
    // Predicated region
    $region6: #{tpu_custom_call.1} parent=1 // pred_check
      _
    $region7: #{tpu_custom_call.1} parent=1 // pred_check_branch
      %11 = sbr.rel (0) target = $region9
    $region8: #{tpu_custom_call.1} parent=1 // pred_region
      _
    $region9: #{tpu_custom_call.1} parent=1 // pred_fallthru
      _
    %v12 = vld [vmem:[%s0] sm:$0xff]
    %v13 = vld [vmem:[%s0 + $0x8] sm:$0xff]
    %v14 = vld [vmem:[%s0 + $0x10] sm:$0xff]
    %v15 = vld [vmem:[%s0 + $0x18] sm:$0xff]
    %v16 = vld [vmem:[%s0 + $0x20] sm:$0xff]
    %v17 = vld [vmem:[%s0 + $0x28] sm:$0xff]
    %v18 = vld [vmem:[%s0 + $0x30] sm:$0xff]
    %v19 = vld [vmem:[%s0 + $0x38] sm:$0xff]
    %v20 = vld [vmem:[%s0 + $0x40] sm:$0xff]
    %v21 = vld [vmem:[%s0 + $0x48] sm:$0xff]
    %v22 = vld [vmem:[%s0 + $0x50] sm:$0xff]
    %v23 = vld [vmem:[%s0 + $0x58] sm:$0xff]
    %v24 = vld [vmem:[%s0 + $0x60] sm:$0xff]
    %v25 = vld [vmem:[%s0 + $0x68] sm:$0xff]
    %v26 = vld [vmem:[%s0 + $0x70] sm:$0xff]
    %v27 = vld [vmem:[%s0 + $0x78] sm:$0xff]
    %v28 = vld [vmem:[%s0 + $0x80] sm:$0xff]
    %v29 = vld [vmem:[%s0 + $0x88] sm:$0xff]
    %v30 = vld [vmem:[%s0 + $0x90] sm:$0xff]
    %v31 = vld [vmem:[%s0 + $0x98] sm:$0xff]
    %v32 = vld [vmem:[%s0 + $0xa0] sm:$0xff]
    %v33 = vld [vmem:[%s0 + $0xa8] sm:$0xff]
    %v34 = vld [vmem:[%s0 + $0xb0] sm:$0xff]
    %v35 = vld [vmem:[%s0 + $0xb8] sm:$0xff]
    %v36 = vld [vmem:[%s0 + $0xc0] sm:$0xff]
    %v37 = vld [vmem:[%s0 + $0xc8] sm:$0xff]
    %v38 = vld [vmem:[%s0 + $0xd0] sm:$0xff]
    %v39 = vld [vmem:[%s0 + $0xd8] sm:$0xff]
    %v40 = vld [vmem:[%s0 + $0xe0] sm:$0xff]
    %v41 = vld [vmem:[%s0 + $0xe8] sm:$0xff]
    %v42 = vld [vmem:[%s0 + $0xf0] sm:$0xff]
    %v43 = vld [vmem:[%s0 + $0xf8] sm:$0xff]
    %v44 = vld [vmem:[%s1] sm:$0xff]
    %vm45 = vcmask 64512
    %v47 = vsel %vm45, %v12, 0
    %v50 = vsel %vm45, %v13, 0
    %v53 = vsel %vm45, %v14, 0
    %v56 = vsel %vm45, %v15, 0
    %v59 = vsel %vm45, %v16, 0
    %v62 = vsel %vm45, %v17, 0
    %v65 = vsel %vm45, %v18, 0
    %v68 = vsel %vm45, %v19, 0
    %v71 = vsel %vm45, %v20, 0
    %v74 = vsel %vm45, %v21, 0
    %v77 = vsel %vm45, %v22, 0
    %v80 = vsel %vm45, %v23, 0
    %v83 = vsel %vm45, %v24, 0
    %v86 = vsel %vm45, %v25, 0
    %v89 = vsel %vm45, %v26, 0
    %v92 = vsel %vm45, %v27, 0
    %v95 = vsel %vm45, %v28, 0
    %v98 = vsel %vm45, %v29, 0
    %v101 = vsel %vm45, %v30, 0
    %v104 = vsel %vm45, %v31, 0
    %v107 = vsel %vm45, %v32, 0
    %v110 = vsel %vm45, %v33, 0
    %v113 = vsel %vm45, %v34, 0
    %v116 = vsel %vm45, %v35, 0
    %v119 = vsel %vm45, %v36, 0
    %v122 = vsel %vm45, %v37, 0
    %v125 = vsel %vm45, %v38, 0
    %v128 = vsel %vm45, %v39, 0
    %v131 = vsel %vm45, %v40, 0
    %v134 = vsel %vm45, %v41, 0
    %v137 = vsel %vm45, %v42, 0
    %v140 = vsel %vm45, %v43, 0
    %142 = vmatpush.msra.mxu0 0.0
    %143 = vmatpush.msra.mxu0 0.0
    %144 = vmatpush.msra.mxu0 0.0
    %145 = vmatpush.msra.mxu0 0.0
    %146 = vmatpush.msra.mxu0 0.0
    %147 = vmatpush.msra.mxu0 0.0
    %148 = vmatpush.msra.mxu0 0.0
    %149 = vmatpush.msra.mxu0 0.0
    %150 = vmatpush.msra.mxu0 0.0
    %151 = vmatpush.msra.mxu0 0.0
    %152 = vmatpush.msra.mxu0 0.0
    %153 = vmatpush.msra.mxu0 0.0
    %154 = vmatpush.msra.mxu0 0.0
    %155 = vmatpush.msra.mxu0 0.0
    %156 = vmatpush.msra.mxu0 0.0
    %157 = vmatpush.msra.mxu0 %v44
    %158 = vmatmul.f32.gmra.mxu0 %v47
    %v159 = vpop.f32.mrf.mxu0
    %v160 = vadd.f32 0.0, %v159
    %161 = vmatmul.f32.gmra.mxu0 %v50
    %v162 = vpop.f32.mrf.mxu0
    %v163 = vadd.f32 0.0, %v162
    %164 = vmatmul.f32.gmra.mxu0 %v53
    %v165 = vpop.f32.mrf.mxu0
    %v166 = vadd.f32 0.0, %v165
    %167 = vmatmul.f32.gmra.mxu0 %v56
    %v168 = vpop.f32.mrf.mxu0
    %v169 = vadd.f32 0.0, %v168
    %170 = vmatmul.f32.gmra.mxu0 %v59
    %v171 = vpop.f32.mrf.mxu0
    %v172 = vadd.f32 0.0, %v171
    %173 = vmatmul.f32.gmra.mxu0 %v62
    %v174 = vpop.f32.mrf.mxu0
    %v175 = vadd.f32 0.0, %v174
    %176 = vmatmul.f32.gmra.mxu0 %v65
    %v177 = vpop.f32.mrf.mxu0
    %v178 = vadd.f32 0.0, %v177
    %179 = vmatmul.f32.gmra.mxu0 %v68
    %v180 = vpop.f32.mrf.mxu0
    %v181 = vadd.f32 0.0, %v180
    %182 = vmatmul.f32.gmra.mxu0 %v71
    %v183 = vpop.f32.mrf.mxu0
    %v184 = vadd.f32 0.0, %v183
    %185 = vmatmul.f32.gmra.mxu0 %v74
    %v186 = vpop.f32.mrf.mxu0
    %v187 = vadd.f32 0.0, %v186
    %188 = vmatmul.f32.gmra.mxu0 %v77
    %v189 = vpop.f32.mrf.mxu0
    %v190 = vadd.f32 0.0, %v189
    %191 = vmatmul.f32.gmra.mxu0 %v80
    %v192 = vpop.f32.mrf.mxu0
    %v193 = vadd.f32 0.0, %v192
    %194 = vmatmul.f32.gmra.mxu0 %v83
    %v195 = vpop.f32.mrf.mxu0
    %v196 = vadd.f32 0.0, %v195
    %197 = vmatmul.f32.gmra.mxu0 %v86
    %v198 = vpop.f32.mrf.mxu0
    %v199 = vadd.f32 0.0, %v198
    %200 = vmatmul.f32.gmra.mxu0 %v89
    %v201 = vpop.f32.mrf.mxu0
    %v202 = vadd.f32 0.0, %v201
    %203 = vmatmul.f32.gmra.mxu0 %v92
    %v204 = vpop.f32.mrf.mxu0
    %v205 = vadd.f32 0.0, %v204
    %206 = vmatmul.f32.gmra.mxu0 %v95
    %v207 = vpop.f32.mrf.mxu0
    %v208 = vadd.f32 0.0, %v207
    %209 = vmatmul.f32.gmra.mxu0 %v98
    %v210 = vpop.f32.mrf.mxu0
    %v211 = vadd.f32 0.0, %v210
    %212 = vmatmul.f32.gmra.mxu0 %v101
    %v213 = vpop.f32.mrf.mxu0
    %v214 = vadd.f32 0.0, %v213
    %215 = vmatmul.f32.gmra.mxu0 %v104
    %v216 = vpop.f32.mrf.mxu0
    %v217 = vadd.f32 0.0, %v216
    %218 = vmatmul.f32.gmra.mxu0 %v107
    %v219 = vpop.f32.mrf.mxu0
    %v220 = vadd.f32 0.0, %v219
    %221 = vmatmul.f32.gmra.mxu0 %v110
    %v222 = vpop.f32.mrf.mxu0
    %v223 = vadd.f32 0.0, %v222
    %224 = vmatmul.f32.gmra.mxu0 %v113
    %v225 = vpop.f32.mrf.mxu0
    %v226 = vadd.f32 0.0, %v225
    %227 = vmatmul.f32.gmra.mxu0 %v116
    %v228 = vpop.f32.mrf.mxu0
    %v229 = vadd.f32 0.0, %v228
    %230 = vmatmul.f32.gmra.mxu0 %v119
    %v231 = vpop.f32.mrf.mxu0
    %v232 = vadd.f32 0.0, %v231
    %233 = vmatmul.f32.gmra.mxu0 %v122
    %v234 = vpop.f32.mrf.mxu0
    %v235 = vadd.f32 0.0, %v234
    %236 = vmatmul.f32.gmra.mxu0 %v125
    %v237 = vpop.f32.mrf.mxu0
    %v238 = vadd.f32 0.0, %v237
    %239 = vmatmul.f32.gmra.mxu0 %v128
    %v240 = vpop.f32.mrf.mxu0
    %v241 = vadd.f32 0.0, %v240
    %242 = vmatmul.f32.gmra.mxu0 %v131
    %v243 = vpop.f32.mrf.mxu0
    %v244 = vadd.f32 0.0, %v243
    %245 = vmatmul.f32.gmra.mxu0 %v134
    %v246 = vpop.f32.mrf.mxu0
    %v247 = vadd.f32 0.0, %v246
    %248 = vmatmul.f32.gmra.mxu0 %v137
    %v249 = vpop.f32.mrf.mxu0
    %v250 = vadd.f32 0.0, %v249
    %251 = vmatmul.f32.gmra.mxu0 %v140
    %v252 = vpop.f32.mrf.mxu0
    %v253 = vadd.f32 0.0, %v252
    %254 = vdwg.mxu0
    %255 = vst [vmem:[#allocation2] sm:$0xff] %v160
    %256 = vst [vmem:[#allocation2 + $0x8] sm:$0xff] %v163
    %257 = vst [vmem:[#allocation2 + $0x10] sm:$0xff] %v166
    %258 = vst [vmem:[#allocation2 + $0x18] sm:$0xff] %v169
    %259 = vst [vmem:[#allocation2 + $0x20] sm:$0xff] %v172
    %260 = vst [vmem:[#allocation2 + $0x28] sm:$0xff] %v175
    %261 = vst [vmem:[#allocation2 + $0x30] sm:$0xff] %v178
    %262 = vst [vmem:[#allocation2 + $0x38] sm:$0xff] %v181
    %263 = vst [vmem:[#allocation2 + $0x40] sm:$0xff] %v184
    %264 = vst [vmem:[#allocation2 + $0x48] sm:$0xff] %v187
    %265 = vst [vmem:[#allocation2 + $0x50] sm:$0xff] %v190
    %266 = vst [vmem:[#allocation2 + $0x58] sm:$0xff] %v193
    %267 = vst [vmem:[#allocation2 + $0x60] sm:$0xff] %v196
    %268 = vst [vmem:[#allocation2 + $0x68] sm:$0xff] %v199
    %269 = vst [vmem:[#allocation2 + $0x70] sm:$0xff] %v202
    %270 = vst [vmem:[#allocation2 + $0x78] sm:$0xff] %v205
    %271 = vst [vmem:[#allocation2 + $0x80] sm:$0xff] %v208
    %272 = vst [vmem:[#allocation2 + $0x88] sm:$0xff] %v211
    %273 = vst [vmem:[#allocation2 + $0x90] sm:$0xff] %v214
    %274 = vst [vmem:[#allocation2 + $0x98] sm:$0xff] %v217
    %275 = vst [vmem:[#allocation2 + $0xa0] sm:$0xff] %v220
    %276 = vst [vmem:[#allocation2 + $0xa8] sm:$0xff] %v223
    %277 = vst [vmem:[#allocation2 + $0xb0] sm:$0xff] %v226
    %278 = vst [vmem:[#allocation2 + $0xb8] sm:$0xff] %v229
    %279 = vst [vmem:[#allocation2 + $0xc0] sm:$0xff] %v232
    %280 = vst [vmem:[#allocation2 + $0xc8] sm:$0xff] %v235
    %281 = vst [vmem:[#allocation2 + $0xd0] sm:$0xff] %v238
    %282 = vst [vmem:[#allocation2 + $0xd8] sm:$0xff] %v241
    %283 = vst [vmem:[#allocation2 + $0xe0] sm:$0xff] %v244
    %284 = vst [vmem:[#allocation2 + $0xe8] sm:$0xff] %v247
    %285 = vst [vmem:[#allocation2 + $0xf0] sm:$0xff] %v250
    %286 = vst [vmem:[#allocation2 + $0xf8] sm:$0xff] %v253
    // Predicated region
    $region10: #{tpu_custom_call.1} parent=1 // pred_check
      _
    $region11: #{tpu_custom_call.1} parent=1 // pred_check_branch
      %288 = sbr.rel (0) target = $region13
    $region12: #{tpu_custom_call.1} parent=1 // pred_region
      %290 = vsyncadd [#allocation3], 0
      %s291 = sshll.u32 [#allocation2], 4
      %s292 = int_to_ptr.vmem [resolvable:$true] %s291
      %s293 = sshll.u32 %s2, 4
      %s294 = int_to_ptr.hbm [resolvable:$true] %s293
      %299 = dma.vmem_to_hbm [thread:$0]  %s292, 4096, %s294, [#allocation3], 128, 128, 8
    $region13: #{tpu_custom_call.1} parent=1 // pred_fallthru
      _
    // Predicated region
    $region14: #{tpu_custom_call.1} parent=1 // pred_check
      _
    $region15: #{tpu_custom_call.1} parent=1 // pred_check_branch
      %301 = sbr.rel (0) target = $region17
    $region16: #{tpu_custom_call.1} parent=1 // pred_region
      %303 = dma.done [#allocation3], 4096
    $region17: #{tpu_custom_call.1} parent=1 // pred_fallthru
      _
    %304 = vsyncpa [#allocation3], 1

</llo_original>
